<compile_context>
chip_gen: v5e
topology: v5e:2x2
jax: 0.10.0
libtpu: 0.0.40
codegen_flags: <defaults>
</compile_context>

<pallas_src>
import functools

import jax
import jax.numpy as jnp
from jax.experimental import pallas as pl
from jax.experimental.pallas import tpu as pltpu

# Mirrors the (relevant subset of) NONLINEARITIES used by the PyTorch module.
_ACT_FNS = {
    "tanh": jnp.tanh,
    "relu": lambda v: jnp.maximum(v, 0.0),
    "sigmoid": jax.nn.sigmoid,
    "elu": jax.nn.elu,
    "softplus": jax.nn.softplus,
    "identity": lambda v: v,
}


def _fused_mlp_kernel(x_ref, *refs, activations):
    """Whole MLP on one transposed (d_in, tile_m) tile.

    Feature-major / batch-minor layout: the batch occupies the 128-wide lane
    dimension, so every intermediate is lane-dense and the final store is a
    full-width vst (not a masked 8/128-lane store).  All intermediates stay
    on-chip; only the final (out_dim, tile_m) tile is written out.
    refs = (w0, b0, w1, b1, ..., o_ref).
    """
    o_ref = refs[-1]
    wb_refs = refs[:-1]
    h = x_ref[...]                                    # (d_in, tile_m)
    for l, act in enumerate(activations):
        w = wb_refs[2 * l][...]                       # (out, in)  — nn.Linear layout
        b = wb_refs[2 * l + 1][...]                   # (out, 1)   — lane broadcast
        h = jnp.dot(w, h,
                    preferred_element_type=jnp.float32,
                    precision=jax.lax.Precision.HIGHEST) + b
        if act is not None:
            h = _ACT_FNS[act](h)                      # tanh/sigmoid/exp -> EUP slot
    o_ref[...] = h.astype(o_ref.dtype)


def _round_up(a, b):
    return ((a + b - 1) // b) * b


def mlp_forward(x, params, nonlinearity, act_last=None, tile_m=4096):
    """Reproduces MLP.forward: activation after every layer except the last,
    unless act_last is set (which replaces the last activation fn).

    x: [batch, input_dim]; params: list of (W (out,in), b (out,1)).
    Returns [batch, out_dim].
    """
    m, d_in = x.shape
    n_layers = len(params)

    activations = []
    for l in range(n_layers):
        if l + 1 < n_layers:
            activations.append(nonlinearity)
        elif act_last is not None:
            activations.append(act_last)
        else:
            activations.append(None)
    activations = tuple(activations)
    out_dim = params[-1][0].shape[0]

    # Batch lives in the lane (last) dimension.  Tile selection:
    #   * tiny batches: one full block (full-extent lane dim is allowed);
    #   * mid-size batches: >=2 blocks of a multiple of 128 lanes so the
    #     "parallel" grid axis can use both v7x TensorCores;
    #   * large batches: tile_m lanes per block (amortizes per-step overhead).
    # No padding: the ragged last block uses Pallas' partial-block handling.
    if m <= 256:
        tm = m
    elif m <= tile_m:
        tm = min(tile_m, _round_up(pl.cdiv(m, 2), 128))
    else:
        tm = tile_m
    grid = (pl.cdiv(m, tm),)

    x_t = x.T  # (d_in, m): lane-dense blocks, long contiguous DMA rows

    flat_wb = []
    wb_specs = []
    for w, b in params:
        flat_wb += [w, b]
        wb_specs += [
            pl.BlockSpec(w.shape, lambda i: (0, 0)),  # tiny; same block every step
            pl.BlockSpec(b.shape, lambda i: (0, 0)),
        ]

    kernel = functools.partial(_fused_mlp_kernel, activations=activations)
    out_t = pl.pallas_call(
        kernel,
        out_shape=jax.ShapeDtypeStruct((out_dim, m), jnp.float32),
        grid=grid,
        in_specs=[pl.BlockSpec((d_in, tm), lambda i: (0, i))] + wb_specs,
        out_specs=pl.BlockSpec((out_dim, tm), lambda i: (0, i)),
        compiler_params=pltpu.CompilerParams(
            dimension_semantics=("parallel",),        # v7x: shard tiles over 2 TCs
            vmem_limit_bytes=32 * 1024 * 1024),       # explicit budget (v7x-safe)
    )(x_t, *flat_wb)
    return out_t.T  # back to [batch, out_dim]


# ----------------------- parameter init (mirrors weights_init) -------------

def glorot_uniform(key, shape):
    """Matches glorot_uniform() for 2D tensors: limit = sqrt(6/(fan_in+fan_out))."""
    fan_in, fan_out = shape
    limit = jnp.sqrt(6.0 / (fan_in + fan_out))
    return jax.random.uniform(key, shape, jnp.float32, minval=-limit, maxval=limit)


def init_mlp_params(key, input_dim, hidden_dims, bias="zero"):
    """Deterministic init mirroring weights_init(): glorot weights, zero biases.

    Weights are kept in the native nn.Linear (out, in) layout (the glorot
    limit is symmetric in fan_in/fan_out); biases stored as (out, 1)."""
    dims = tuple(map(int, hidden_dims.split("-")))
    params = []
    prev = input_dim
    for h in dims:
        key, wk, bk = jax.random.split(key, 3)
        w = glorot_uniform(wk, (h, prev))
        if bias == "zero":
            b = jnp.zeros((h, 1), jnp.float32)
        else:  # 'normal'
            b = jax.random.normal(bk, (h, 1), jnp.float32)
        params.append((w, b))
        prev = h
    return params


def _mlp_reference(x, params, nonlinearity, act_last=None):
    """Pure-JAX reference for correctness checking (f32, highest precision)."""
    n_layers = len(params)
    for l, (w, b) in enumerate(params):
        x = jnp.dot(x, w.T, precision=jax.lax.Precision.HIGHEST) + b.reshape(1, -1)
        if l + 1 < n_layers:
            x = _ACT_FNS[nonlinearity](x)
        elif act_last is not None:
            x = _ACT_FNS[act_last](x)
    return x


if __name__ == "__main__":
    key = jax.random.PRNGKey(0)
    key, xk, pk, xk2 = jax.random.split(key, 4)

    batch = 8
    input_dim = 16
    hidden_dims = "32-32-8"
    nonlinearity = "tanh"
    act_last = None

    params = init_mlp_params(pk, input_dim, hidden_dims, bias="zero")

    # Small-batch path (single full-block tile).
    x = jax.random.normal(xk, (batch, input_dim), jnp.float32)
    out = mlp_forward(x, params, nonlinearity, act_last)
    jax.block_until_ready(out)
    assert out.shape == (batch, 8), out.shape
    ref = _mlp_reference(x, params, nonlinearity, act_last)
    assert jnp.allclose(out, ref, rtol=1e-4, atol=1e-4), "mismatch vs reference"

    # Larger-batch path: 2 grid steps (512-lane blocks), ragged last block —
    # exercises the partial-block DMA path and the multi-TC grid, with no pad.
    x_big = jax.random.normal(xk2, (1000, input_dim), jnp.float32)
    out_big = mlp_forward(x_big, params, nonlinearity, act_last)
    jax.block_until_ready(out_big)
    assert out_big.shape == (1000, 8), out_big.shape
    ref_big = _mlp_reference(x_big, params, nonlinearity, act_last)
    assert jnp.allclose(out_big, ref_big, rtol=1e-4, atol=1e-4), "mismatch vs reference"

    print("KERNEL_OK")
</pallas_src>

<mosaic_0001>
module attributes {stable_mosaic.version = 11 : i64} {
  func.func @_fused_mlp_kernel(%arg0: i32, %arg1: memref<16x8xf32, #tpu.memory_space<vmem>>, %arg2: memref<32x16xf32, #tpu.memory_space<vmem>>, %arg3: memref<32x1xf32, #tpu.memory_space<vmem>>, %arg4: memref<32x32xf32, #tpu.memory_space<vmem>>, %arg5: memref<32x1xf32, #tpu.memory_space<vmem>>, %arg6: memref<8x32xf32, #tpu.memory_space<vmem>>, %arg7: memref<8x1xf32, #tpu.memory_space<vmem>>, %arg8: memref<8x8xf32, #tpu.memory_space<vmem>>) attributes {dimension_semantics = [#tpu.dimension_semantics<parallel>], iteration_bounds = array<i64: 1>, scalar_prefetch = 0 : i64, scratch_operands = 0 : i64, tpu.core_type = #tpu.core_type<tc>, window_params = [{transform_indices = @transform_0, window_bounds = array<i64: 16, 8>}, {pipeline_mode = #tpu.pipeline_mode<synchronous>, transform_indices = @transform_1, window_bounds = array<i64: 32, 16>}, {pipeline_mode = #tpu.pipeline_mode<synchronous>, transform_indices = @transform_2, window_bounds = array<i64: 32, 1>}, {pipeline_mode = #tpu.pipeline_mode<synchronous>, transform_indices = @transform_3, window_bounds = array<i64: 32, 32>}, {pipeline_mode = #tpu.pipeline_mode<synchronous>, transform_indices = @transform_4, window_bounds = array<i64: 32, 1>}, {pipeline_mode = #tpu.pipeline_mode<synchronous>, transform_indices = @transform_5, window_bounds = array<i64: 8, 32>}, {pipeline_mode = #tpu.pipeline_mode<synchronous>, transform_indices = @transform_6, window_bounds = array<i64: 8, 1>}, {transform_indices = @transform_7, window_bounds = array<i64: 8, 8>}]} {
    %c0 = arith.constant 0 : index
    %c0_0 = arith.constant 0 : index
    %0 = vector.load %arg1[%c0, %c0_0] : memref<16x8xf32, #tpu.memory_space<vmem>>, vector<16x8xf32>
    %c0_1 = arith.constant 0 : index
    %c0_2 = arith.constant 0 : index
    %1 = vector.load %arg2[%c0_1, %c0_2] : memref<32x16xf32, #tpu.memory_space<vmem>>, vector<32x16xf32>
    %c0_3 = arith.constant 0 : index
    %c0_4 = arith.constant 0 : index
    %2 = vector.load %arg3[%c0_3, %c0_4] : memref<32x1xf32, #tpu.memory_space<vmem>>, vector<32x1xf32>
    %cst = arith.constant dense<0.000000e+00> : vector<32x8xf32>
    %3 = tpu.matmul %1, %0, %cst {dimension_numbers = #tpu.dot_dimension_numbers<[1], [0], [0], [1], [0, 0, 1, 1], [], []>, precision = #tpu.contract_precision<fp32>} : vector<32x16xf32>, vector<16x8xf32>, vector<32x8xf32> -> vector<32x8xf32>
    %4 = vector.broadcast %2 : vector<32x1xf32> to vector<32x8xf32>
    %5 = arith.addf %3, %4 : vector<32x8xf32>
    %6 = math.tanh %5 : vector<32x8xf32>
    %c0_5 = arith.constant 0 : index
    %c0_6 = arith.constant 0 : index
    %7 = vector.load %arg4[%c0_5, %c0_6] : memref<32x32xf32, #tpu.memory_space<vmem>>, vector<32x32xf32>
    %c0_7 = arith.constant 0 : index
    %c0_8 = arith.constant 0 : index
    %8 = vector.load %arg5[%c0_7, %c0_8] : memref<32x1xf32, #tpu.memory_space<vmem>>, vector<32x1xf32>
    %cst_9 = arith.constant dense<0.000000e+00> : vector<32x8xf32>
    %9 = tpu.matmul %7, %6, %cst_9 {dimension_numbers = #tpu.dot_dimension_numbers<[1], [0], [0], [1], [0, 0, 1, 1], [], []>, precision = #tpu.contract_precision<fp32>} : vector<32x32xf32>, vector<32x8xf32>, vector<32x8xf32> -> vector<32x8xf32>
    %10 = vector.broadcast %8 : vector<32x1xf32> to vector<32x8xf32>
    %11 = arith.addf %9, %10 : vector<32x8xf32>
    %12 = math.tanh %11 : vector<32x8xf32>
    %c0_10 = arith.constant 0 : index
    %c0_11 = arith.constant 0 : index
    %13 = vector.load %arg6[%c0_10, %c0_11] : memref<8x32xf32, #tpu.memory_space<vmem>>, vector<8x32xf32>
    %c0_12 = arith.constant 0 : index
    %c0_13 = arith.constant 0 : index
    %14 = vector.load %arg7[%c0_12, %c0_13] : memref<8x1xf32, #tpu.memory_space<vmem>>, vector<8x1xf32>
    %cst_14 = arith.constant dense<0.000000e+00> : vector<8x8xf32>
    %15 = tpu.matmul %13, %12, %cst_14 {dimension_numbers = #tpu.dot_dimension_numbers<[1], [0], [0], [1], [0, 0, 1, 1], [], []>, precision = #tpu.contract_precision<fp32>} : vector<8x32xf32>, vector<32x8xf32>, vector<8x8xf32> -> vector<8x8xf32>
    %16 = vector.broadcast %14 : vector<8x1xf32> to vector<8x8xf32>
    %17 = arith.addf %15, %16 : vector<8x8xf32>
    %c0_15 = arith.constant 0 : index
    %c0_16 = arith.constant 0 : index
    %18 = vector.load %arg8[%c0_15, %c0_16] : memref<8x8xf32, #tpu.memory_space<vmem>>, vector<8x8xf32>
    tpu.vector_store %arg8[%c0_15, %c0_16], %17 {strides = array<i32>} : memref<8x8xf32, #tpu.memory_space<vmem>>, vector<8x8xf32>,
    return
  }
  func.func @transform_0(%arg0: i32) -> (i32, i32) {
    %c0_i32 = arith.constant 0 : i32
    %c0_i32_0 = arith.constant 0 : i32
    return %c0_i32, %arg0 : i32, i32
  }
  func.func @transform_1(%arg0: i32) -> (i32, i32) {
    %c0_i32 = arith.constant 0 : i32
    %c0_i32_0 = arith.constant 0 : i32
    %c0_i32_1 = arith.constant 0 : i32
    return %c0_i32, %c0_i32_0 : i32, i32
  }
  func.func @transform_2(%arg0: i32) -> (i32, i32) {
    %c0_i32 = arith.constant 0 : i32
    %c0_i32_0 = arith.constant 0 : i32
    %c0_i32_1 = arith.constant 0 : i32
    return %c0_i32, %c0_i32_0 : i32, i32
  }
  func.func @transform_3(%arg0: i32) -> (i32, i32) {
    %c0_i32 = arith.constant 0 : i32
    %c0_i32_0 = arith.constant 0 : i32
    %c0_i32_1 = arith.constant 0 : i32
    return %c0_i32, %c0_i32_0 : i32, i32
  }
  func.func @transform_4(%arg0: i32) -> (i32, i32) {
    %c0_i32 = arith.constant 0 : i32
    %c0_i32_0 = arith.constant 0 : i32
    %c0_i32_1 = arith.constant 0 : i32
    return %c0_i32, %c0_i32_0 : i32, i32
  }
  func.func @transform_5(%arg0: i32) -> (i32, i32) {
    %c0_i32 = arith.constant 0 : i32
    %c0_i32_0 = arith.constant 0 : i32
    %c0_i32_1 = arith.constant 0 : i32
    return %c0_i32, %c0_i32_0 : i32, i32
  }
  func.func @transform_6(%arg0: i32) -> (i32, i32) {
    %c0_i32 = arith.constant 0 : i32
    %c0_i32_0 = arith.constant 0 : i32
    %c0_i32_1 = arith.constant 0 : i32
    return %c0_i32, %c0_i32_0 : i32, i32
  }
  func.func @transform_7(%arg0: i32) -> (i32, i32) {
    %c0_i32 = arith.constant 0 : i32
    %c0_i32_0 = arith.constant 0 : i32
    return %c0_i32, %arg0 : i32, i32
  }
}

</mosaic_0001>

<llo_original>
// kernel: tpu_custom_call.1
$region0: #{tpu_custom_call.1}
  #allocation0 [shape = 'u32[]', space=smem, size = 0x4, offset = 0x4, fixed_abs, tag = 'smem constant byte address 0x4 - core index']
  #allocation1 [shape = 'u32[72,128]{1,0:T(1,128)}', space=vmem, size = 0x9000, scoped, tag = 'internal scratch']
  %s0 = inlined_call_operand.vmem [shape: f32[16,8], index: 0, kind: input, shape index: {}]
  %s1 = inlined_call_operand.vmem [shape: f32[32,16], index: 1, kind: input, shape index: {}]
  %s2 = inlined_call_operand.vmem [shape: f32[32,1], index: 2, kind: input, shape index: {}]
  %s3 = inlined_call_operand.vmem [shape: f32[32,32], index: 3, kind: input, shape index: {}]
  %s4 = inlined_call_operand.vmem [shape: f32[32,1], index: 4, kind: input, shape index: {}]
  %s5 = inlined_call_operand.vmem [shape: f32[8,32], index: 5, kind: input, shape index: {}]
  %s6 = inlined_call_operand.vmem [shape: f32[8,1], index: 6, kind: input, shape index: {}]
  %s7 = inlined_call_operand.hbm [shape: f32[8,8], index: 7, kind: output, shape index: {}]
  %s8 = sld [smem:[#allocation0]]
  $region38: #{tpu_custom_call.1} parent=0
    _
  %s10 = ssub.s32 1, %s8
  %s11 = scalar_select 0, %s10, %s8
  $region1: #{tpu_custom_call.1} parent=0
    #allocation2 [shape = 'u8[4096]{0}', space=vmem, size = 0x1000, scoped, tag = 'output window, operand 0, single buffered']
    #allocation3 [shape = 's32[1]{0}', space=sflag, size = 0x4, scoped, tag = 'scoped memory for tpu_custom_call.1']
    %12 = vsyncpa [#allocation3], 0
    // Predicated region
    $region2: #{tpu_custom_call.1} parent=1 // pred_check
      _
    $region3: #{tpu_custom_call.1} parent=1 // pred_check_branch
      %14 = sbr.rel (0) target = $region5
    $region4: #{tpu_custom_call.1} parent=1 // pred_region
      _
    $region5: #{tpu_custom_call.1} parent=1 // pred_fallthru
      _
    // Predicated region
    $region6: #{tpu_custom_call.1} parent=1 // pred_check
      _
    $region7: #{tpu_custom_call.1} parent=1 // pred_check_branch
      %16 = sbr.rel (0) target = $region9
    $region8: #{tpu_custom_call.1} parent=1 // pred_region
      _
    $region9: #{tpu_custom_call.1} parent=1 // pred_fallthru
      _
    // Predicated region
    $region10: #{tpu_custom_call.1} parent=1 // pred_check
      _
    $region11: #{tpu_custom_call.1} parent=1 // pred_check_branch
      %18 = sbr.rel (0) target = $region13
    $region12: #{tpu_custom_call.1} parent=1 // pred_region
      _
    $region13: #{tpu_custom_call.1} parent=1 // pred_fallthru
      _
    // Predicated region
    $region14: #{tpu_custom_call.1} parent=1 // pred_check
      _
    $region15: #{tpu_custom_call.1} parent=1 // pred_check_branch
      %20 = sbr.rel (0) target = $region17
    $region16: #{tpu_custom_call.1} parent=1 // pred_region
      _
    $region17: #{tpu_custom_call.1} parent=1 // pred_fallthru
      _
    // Predicated region
    $region18: #{tpu_custom_call.1} parent=1 // pred_check
      _
    $region19: #{tpu_custom_call.1} parent=1 // pred_check_branch
      %22 = sbr.rel (0) target = $region21
    $region20: #{tpu_custom_call.1} parent=1 // pred_region
      _
    $region21: #{tpu_custom_call.1} parent=1 // pred_fallthru
      _
    // Predicated region
    $region22: #{tpu_custom_call.1} parent=1 // pred_check
      _
    $region23: #{tpu_custom_call.1} parent=1 // pred_check_branch
      %24 = sbr.rel (0) target = $region25
    $region24: #{tpu_custom_call.1} parent=1 // pred_region
      _
    $region25: #{tpu_custom_call.1} parent=1 // pred_fallthru
      _
    // Predicated region
    $region26: #{tpu_custom_call.1} parent=1 // pred_check
      _
    $region27: #{tpu_custom_call.1} parent=1 // pred_check_branch
      %26 = sbr.rel (0) target = $region29
    $region28: #{tpu_custom_call.1} parent=1 // pred_region
      _
    $region29: #{tpu_custom_call.1} parent=1 // pred_fallthru
      _
    %v27 = vld [vmem:[%s0] sm:$0xff]
    %v28 = vld [vmem:[%s0 + $0x8] sm:$0xff]
    %v29 = vld [vmem:[%s1] sm:$0xff]
    %v30 = vld [vmem:[%s1 + $0x8] sm:$0xff]
    %v31 = vld [vmem:[%s1 + $0x10] sm:$0xff]
    %v32 = vld [vmem:[%s1 + $0x18] sm:$0xff]
    %v33 = vld [vmem:[%s2] sm:$0xff]
    %v34 = vld [vmem:[%s2 + $0x8] sm:$0xff]
    %v35 = vld [vmem:[%s2 + $0x10] sm:$0xff]
    %v36 = vld [vmem:[%s2 + $0x18] sm:$0xff]
    %38 = vset.pattern.permute.xlu0 0
    %39 = vperm.xlu0 %38, %v33
    %v40 = vpop.permute.xlu0 %39
    %43 = vset.pattern.permute.xlu0 0
    %44 = vperm.xlu0 %43, %v34
    %v45 = vpop.permute.xlu0 %44
    %48 = vset.pattern.permute.xlu0 0
    %49 = vperm.xlu0 %48, %v35
    %v50 = vpop.permute.xlu0 %49
    %53 = vset.pattern.permute.xlu0 0
    %54 = vperm.xlu0 %53, %v36
    %v55 = vpop.permute.xlu0 %54
    %vm57 = vcmask 130048
    %v59 = vsel %vm57, %v29, 0
    %v62 = vsel %vm57, %v30, 0
    %v65 = vsel %vm57, %v31, 0
    %v68 = vsel %vm57, %v32, 0
    %70 = vmatpush.msra.mxu0 0.0
    %71 = vmatpush.msra.mxu0 0.0
    %72 = vmatpush.msra.mxu0 0.0
    %73 = vmatpush.msra.mxu0 0.0
    %74 = vmatpush.msra.mxu0 0.0
    %75 = vmatpush.msra.mxu0 0.0
    %76 = vmatpush.msra.mxu0 0.0
    %77 = vmatpush.msra.mxu0 0.0
    %78 = vmatpush.msra.mxu0 0.0
    %79 = vmatpush.msra.mxu0 0.0
    %80 = vmatpush.msra.mxu0 0.0
    %81 = vmatpush.msra.mxu0 0.0
    %82 = vmatpush.msra.mxu0 0.0
    %83 = vmatpush.msra.mxu0 0.0
    %v84 = vand.u32 %v28, 4294901760
    %85 = vmatpush.msra.mxu0 %v84
    %v86 = vand.u32 %v27, 4294901760
    %87 = vmatpush.msra.mxu0 %v86
    %v88 = vand.u32 %v59, 4294901760
    %v89 = vsub.f32 %v59, %v88
    %v90 = vand.u32 %v89, 4294901760
    %v91 = vsub.f32 %v89, %v90
    %v92 = vand.u32 %v91, 4294901760
    %93 = vmatmul.f32.gmra.mxu0 %v92
    %v94 = vpop.f32.mrf.mxu0
    %v95 = vadd.f32 %v40, %v94
    %v96 = vand.u32 %v62, 4294901760
    %v97 = vsub.f32 %v62, %v96
    %v98 = vand.u32 %v97, 4294901760
    %v99 = vsub.f32 %v97, %v98
    %v100 = vand.u32 %v99, 4294901760
    %101 = vmatmul.f32.gmra.mxu0 %v100
    %v102 = vpop.f32.mrf.mxu0
    %v103 = vadd.f32 %v45, %v102
    %v104 = vand.u32 %v65, 4294901760
    %v105 = vsub.f32 %v65, %v104
    %v106 = vand.u32 %v105, 4294901760
    %v107 = vsub.f32 %v105, %v106
    %v108 = vand.u32 %v107, 4294901760
    %109 = vmatmul.f32.gmra.mxu0 %v108
    %v110 = vpop.f32.mrf.mxu0
    %v111 = vadd.f32 %v50, %v110
    %v112 = vand.u32 %v68, 4294901760
    %v113 = vsub.f32 %v68, %v112
    %v114 = vand.u32 %v113, 4294901760
    %v115 = vsub.f32 %v113, %v114
    %v116 = vand.u32 %v115, 4294901760
    %117 = vmatmul.f32.gmra.mxu0 %v116
    %v118 = vpop.f32.mrf.mxu0
    %v119 = vadd.f32 %v55, %v118
    %120 = vdwg.mxu0
    %121 = vmatpush.msra.mxu0 0.0
    %122 = vmatpush.msra.mxu0 0.0
    %123 = vmatpush.msra.mxu0 0.0
    %124 = vmatpush.msra.mxu0 0.0
    %125 = vmatpush.msra.mxu0 0.0
    %126 = vmatpush.msra.mxu0 0.0
    %127 = vmatpush.msra.mxu0 0.0
    %128 = vmatpush.msra.mxu0 0.0
    %129 = vmatpush.msra.mxu0 0.0
    %130 = vmatpush.msra.mxu0 0.0
    %131 = vmatpush.msra.mxu0 0.0
    %132 = vmatpush.msra.mxu0 0.0
    %133 = vmatpush.msra.mxu0 0.0
    %134 = vmatpush.msra.mxu0 0.0
    %v135 = vand.u32 %v28, 4294901760
    %v136 = vsub.f32 %v28, %v135
    %v137 = vand.u32 %v136, 4294901760
    %v138 = vsub.f32 %v136, %v137
    %v139 = vand.u32 %v138, 4294901760
    %140 = vmatpush.msra.mxu0 %v139
    %v141 = vand.u32 %v27, 4294901760
    %v142 = vsub.f32 %v27, %v141
    %v143 = vand.u32 %v142, 4294901760
    %v144 = vsub.f32 %v142, %v143
    %v145 = vand.u32 %v144, 4294901760
    %146 = vmatpush.msra.mxu0 %v145
    %v147 = vand.u32 %v59, 4294901760
    %148 = vmatmul.f32.gmra.mxu0 %v147
    %v149 = vpop.f32.mrf.mxu0
    %v150 = vadd.f32 %v95, %v149
    %v151 = vand.u32 %v62, 4294901760
    %152 = vmatmul.f32.gmra.mxu0 %v151
    %v153 = vpop.f32.mrf.mxu0
    %v154 = vadd.f32 %v103, %v153
    %v155 = vand.u32 %v65, 4294901760
    %156 = vmatmul.f32.gmra.mxu0 %v155
    %v157 = vpop.f32.mrf.mxu0
    %v158 = vadd.f32 %v111, %v157
    %v159 = vand.u32 %v68, 4294901760
    %160 = vmatmul.f32.gmra.mxu0 %v159
    %v161 = vpop.f32.mrf.mxu0
    %v162 = vadd.f32 %v119, %v161
    %163 = vdwg.mxu0
    %164 = vmatpush.msra.mxu0 0.0
    %165 = vmatpush.msra.mxu0 0.0
    %166 = vmatpush.msra.mxu0 0.0
    %167 = vmatpush.msra.mxu0 0.0
    %168 = vmatpush.msra.mxu0 0.0
    %169 = vmatpush.msra.mxu0 0.0
    %170 = vmatpush.msra.mxu0 0.0
    %171 = vmatpush.msra.mxu0 0.0
    %172 = vmatpush.msra.mxu0 0.0
    %173 = vmatpush.msra.mxu0 0.0
    %174 = vmatpush.msra.mxu0 0.0
    %175 = vmatpush.msra.mxu0 0.0
    %176 = vmatpush.msra.mxu0 0.0
    %177 = vmatpush.msra.mxu0 0.0
    %v178 = vand.u32 %v28, 4294901760
    %v179 = vsub.f32 %v28, %v178
    %180 = vmatpush.msra.mxu0 %v179
    %v181 = vand.u32 %v27, 4294901760
    %v182 = vsub.f32 %v27, %v181
    %183 = vmatpush.msra.mxu0 %v182
    %v184 = vand.u32 %v59, 4294901760
    %v185 = vsub.f32 %v59, %v184
    %186 = vmatmul.f32.gmra.mxu0 %v185
    %v187 = vpop.f32.mrf.mxu0
    %v188 = vadd.f32 %v150, %v187
    %v189 = vand.u32 %v62, 4294901760
    %v190 = vsub.f32 %v62, %v189
    %191 = vmatmul.f32.gmra.mxu0 %v190
    %v192 = vpop.f32.mrf.mxu0
    %v193 = vadd.f32 %v154, %v192
    %v194 = vand.u32 %v65, 4294901760
    %v195 = vsub.f32 %v65, %v194
    %196 = vmatmul.f32.gmra.mxu0 %v195
    %v197 = vpop.f32.mrf.mxu0
    %v198 = vadd.f32 %v158, %v197
    %v199 = vand.u32 %v68, 4294901760
    %v200 = vsub.f32 %v68, %v199
    %201 = vmatmul.f32.gmra.mxu0 %v200
    %v202 = vpop.f32.mrf.mxu0
    %v203 = vadd.f32 %v162, %v202
    %204 = vdwg.mxu0
    %205 = vmatpush.msra.mxu0 0.0
    %206 = vmatpush.msra.mxu0 0.0
    %207 = vmatpush.msra.mxu0 0.0
    %208 = vmatpush.msra.mxu0 0.0
    %209 = vmatpush.msra.mxu0 0.0
    %210 = vmatpush.msra.mxu0 0.0
    %211 = vmatpush.msra.mxu0 0.0
    %212 = vmatpush.msra.mxu0 0.0
    %213 = vmatpush.msra.mxu0 0.0
    %214 = vmatpush.msra.mxu0 0.0
    %215 = vmatpush.msra.mxu0 0.0
    %216 = vmatpush.msra.mxu0 0.0
    %217 = vmatpush.msra.mxu0 0.0
    %218 = vmatpush.msra.mxu0 0.0
    %v219 = vand.u32 %v28, 4294901760
    %220 = vmatpush.msra.mxu0 %v219
    %v221 = vand.u32 %v27, 4294901760
    %222 = vmatpush.msra.mxu0 %v221
    %v223 = vand.u32 %v59, 4294901760
    %v224 = vsub.f32 %v59, %v223
    %v225 = vand.u32 %v224, 4294901760
    %226 = vmatmul.f32.gmra.mxu0 %v225
    %v227 = vpop.f32.mrf.mxu0
    %v228 = vadd.f32 %v188, %v227
    %v229 = vand.u32 %v62, 4294901760
    %v230 = vsub.f32 %v62, %v229
    %v231 = vand.u32 %v230, 4294901760
    %232 = vmatmul.f32.gmra.mxu0 %v231
    %v233 = vpop.f32.mrf.mxu0
    %v234 = vadd.f32 %v193, %v233
    %v235 = vand.u32 %v65, 4294901760
    %v236 = vsub.f32 %v65, %v235
    %v237 = vand.u32 %v236, 4294901760
    %238 = vmatmul.f32.gmra.mxu0 %v237
    %v239 = vpop.f32.mrf.mxu0
    %v240 = vadd.f32 %v198, %v239
    %v241 = vand.u32 %v68, 4294901760
    %v242 = vsub.f32 %v68, %v241
    %v243 = vand.u32 %v242, 4294901760
    %244 = vmatmul.f32.gmra.mxu0 %v243
    %v245 = vpop.f32.mrf.mxu0
    %v246 = vadd.f32 %v203, %v245
    %247 = vdwg.mxu0
    %248 = vmatpush.msra.mxu0 0.0
    %249 = vmatpush.msra.mxu0 0.0
    %250 = vmatpush.msra.mxu0 0.0
    %251 = vmatpush.msra.mxu0 0.0
    %252 = vmatpush.msra.mxu0 0.0
    %253 = vmatpush.msra.mxu0 0.0
    %254 = vmatpush.msra.mxu0 0.0
    %255 = vmatpush.msra.mxu0 0.0
    %256 = vmatpush.msra.mxu0 0.0
    %257 = vmatpush.msra.mxu0 0.0
    %258 = vmatpush.msra.mxu0 0.0
    %259 = vmatpush.msra.mxu0 0.0
    %260 = vmatpush.msra.mxu0 0.0
    %261 = vmatpush.msra.mxu0 0.0
    %v262 = vand.u32 %v28, 4294901760
    %v263 = vsub.f32 %v28, %v262
    %v264 = vand.u32 %v263, 4294901760
    %265 = vmatpush.msra.mxu0 %v264
    %v266 = vand.u32 %v27, 4294901760
    %v267 = vsub.f32 %v27, %v266
    %v268 = vand.u32 %v267, 4294901760
    %269 = vmatpush.msra.mxu0 %v268
    %v270 = vand.u32 %v59, 4294901760
    %271 = vmatmul.f32.gmra.mxu0 %v270
    %v272 = vpop.f32.mrf.mxu0
    %v273 = vadd.f32 %v228, %v272
    %v274 = vand.u32 %v62, 4294901760
    %275 = vmatmul.f32.gmra.mxu0 %v274
    %v276 = vpop.f32.mrf.mxu0
    %v277 = vadd.f32 %v234, %v276
    %v278 = vand.u32 %v65, 4294901760
    %279 = vmatmul.f32.gmra.mxu0 %v278
    %v280 = vpop.f32.mrf.mxu0
    %v281 = vadd.f32 %v240, %v280
    %v282 = vand.u32 %v68, 4294901760
    %283 = vmatmul.f32.gmra.mxu0 %v282
    %v284 = vpop.f32.mrf.mxu0
    %v285 = vadd.f32 %v246, %v284
    %286 = vdwg.mxu0
    %287 = vmatpush.msra.mxu0 0.0
    %288 = vmatpush.msra.mxu0 0.0
    %289 = vmatpush.msra.mxu0 0.0
    %290 = vmatpush.msra.mxu0 0.0
    %291 = vmatpush.msra.mxu0 0.0
    %292 = vmatpush.msra.mxu0 0.0
    %293 = vmatpush.msra.mxu0 0.0
    %294 = vmatpush.msra.mxu0 0.0
    %295 = vmatpush.msra.mxu0 0.0
    %296 = vmatpush.msra.mxu0 0.0
    %297 = vmatpush.msra.mxu0 0.0
    %298 = vmatpush.msra.mxu0 0.0
    %299 = vmatpush.msra.mxu0 0.0
    %300 = vmatpush.msra.mxu0 0.0
    %v301 = vand.u32 %v28, 4294901760
    %302 = vmatpush.msra.mxu0 %v301
    %v303 = vand.u32 %v27, 4294901760
    %304 = vmatpush.msra.mxu0 %v303
    %v305 = vand.u32 %v59, 4294901760
    %306 = vmatmul.f32.gmra.mxu0 %v305
    %v307 = vpop.f32.mrf.mxu0
    %v308 = vadd.f32 %v273, %v307
    %v309 = vand.u32 %v62, 4294901760
    %310 = vmatmul.f32.gmra.mxu0 %v309
    %v311 = vpop.f32.mrf.mxu0
    %v312 = vadd.f32 %v277, %v311
    %v313 = vand.u32 %v65, 4294901760
    %314 = vmatmul.f32.gmra.mxu0 %v313
    %v315 = vpop.f32.mrf.mxu0
    %v316 = vadd.f32 %v281, %v315
    %v317 = vand.u32 %v68, 4294901760
    %318 = vmatmul.f32.gmra.mxu0 %v317
    %v319 = vpop.f32.mrf.mxu0
    %v320 = vadd.f32 %v285, %v319
    %321 = vdwg.mxu0
    %v322 = vtanh.pop %v308
    %v323 = vtanh.pop %v312
    %v324 = vtanh.pop %v316
    %v325 = vtanh.pop %v320
    %v326 = vld [vmem:[%s3] sm:$0xff]
    %v327 = vld [vmem:[%s3 + $0x8] sm:$0xff]
    %v328 = vld [vmem:[%s3 + $0x10] sm:$0xff]
    %v329 = vld [vmem:[%s3 + $0x18] sm:$0xff]
    %v330 = vld [vmem:[%s4] sm:$0xff]
    %v331 = vld [vmem:[%s4 + $0x8] sm:$0xff]
    %v332 = vld [vmem:[%s4 + $0x10] sm:$0xff]
    %v333 = vld [vmem:[%s4 + $0x18] sm:$0xff]
    %335 = vset.pattern.permute.xlu0 0
    %336 = vperm.xlu0 %335, %v330
    %v337 = vpop.permute.xlu0 %336
    %340 = vset.pattern.permute.xlu0 0
    %341 = vperm.xlu0 %340, %v331
    %v342 = vpop.permute.xlu0 %341
    %345 = vset.pattern.permute.xlu0 0
    %346 = vperm.xlu0 %345, %v332
    %v347 = vpop.permute.xlu0 %346
    %350 = vset.pattern.permute.xlu0 0
    %351 = vperm.xlu0 %350, %v333
    %v352 = vpop.permute.xlu0 %351
    %vm354 = vcmask 261120
    %v356 = vsel %vm354, %v326, 0
    %v359 = vsel %vm354, %v327, 0
    %v362 = vsel %vm354, %v328, 0
    %v365 = vsel %vm354, %v329, 0
    %367 = vmatpush.msra.mxu0 0.0
    %368 = vmatpush.msra.mxu0 0.0
    %369 = vmatpush.msra.mxu0 0.0
    %370 = vmatpush.msra.mxu0 0.0
    %371 = vmatpush.msra.mxu0 0.0
    %372 = vmatpush.msra.mxu0 0.0
    %373 = vmatpush.msra.mxu0 0.0
    %374 = vmatpush.msra.mxu0 0.0
    %375 = vmatpush.msra.mxu0 0.0
    %376 = vmatpush.msra.mxu0 0.0
    %377 = vmatpush.msra.mxu0 0.0
    %378 = vmatpush.msra.mxu0 0.0
    %v379 = vand.u32 %v325, 4294901760
    %380 = vmatpush.msra.mxu0 %v379
    %v381 = vand.u32 %v324, 4294901760
    %382 = vmatpush.msra.mxu0 %v381
    %v383 = vand.u32 %v323, 4294901760
    %384 = vmatpush.msra.mxu0 %v383
    %v385 = vand.u32 %v322, 4294901760
    %386 = vmatpush.msra.mxu0 %v385
    %v387 = vand.u32 %v356, 4294901760
    %v388 = vsub.f32 %v356, %v387
    %v389 = vand.u32 %v388, 4294901760
    %v390 = vsub.f32 %v388, %v389
    %v391 = vand.u32 %v390, 4294901760
    %392 = vmatmul.f32.gmra.mxu0 %v391
    %v393 = vpop.f32.mrf.mxu0
    %v394 = vadd.f32 %v337, %v393
    %v395 = vand.u32 %v359, 4294901760
    %v396 = vsub.f32 %v359, %v395
    %v397 = vand.u32 %v396, 4294901760
    %v398 = vsub.f32 %v396, %v397
    %v399 = vand.u32 %v398, 4294901760
    %400 = vmatmul.f32.gmra.mxu0 %v399
    %v401 = vpop.f32.mrf.mxu0
    %v402 = vadd.f32 %v342, %v401
    %v403 = vand.u32 %v362, 4294901760
    %v404 = vsub.f32 %v362, %v403
    %v405 = vand.u32 %v404, 4294901760
    %v406 = vsub.f32 %v404, %v405
    %v407 = vand.u32 %v406, 4294901760
    %408 = vmatmul.f32.gmra.mxu0 %v407
    %v409 = vpop.f32.mrf.mxu0
    %v410 = vadd.f32 %v347, %v409
    %v411 = vand.u32 %v365, 4294901760
    %v412 = vsub.f32 %v365, %v411
    %v413 = vand.u32 %v412, 4294901760
    %v414 = vsub.f32 %v412, %v413
    %v415 = vand.u32 %v414, 4294901760
    %416 = vmatmul.f32.gmra.mxu0 %v415
    %v417 = vpop.f32.mrf.mxu0
    %v418 = vadd.f32 %v352, %v417
    %419 = vdwg.mxu0
    %420 = vmatpush.msra.mxu0 0.0
    %421 = vmatpush.msra.mxu0 0.0
    %422 = vmatpush.msra.mxu0 0.0
    %423 = vmatpush.msra.mxu0 0.0
    %424 = vmatpush.msra.mxu0 0.0
    %425 = vmatpush.msra.mxu0 0.0
    %426 = vmatpush.msra.mxu0 0.0
    %427 = vmatpush.msra.mxu0 0.0
    %428 = vmatpush.msra.mxu0 0.0
    %429 = vmatpush.msra.mxu0 0.0
    %430 = vmatpush.msra.mxu0 0.0
    %431 = vmatpush.msra.mxu0 0.0
    %v432 = vand.u32 %v325, 4294901760
    %v433 = vsub.f32 %v325, %v432
    %v434 = vand.u32 %v433, 4294901760
    %v435 = vsub.f32 %v433, %v434
    %v436 = vand.u32 %v435, 4294901760
    %437 = vmatpush.msra.mxu0 %v436
    %v438 = vand.u32 %v324, 4294901760
    %v439 = vsub.f32 %v324, %v438
    %v440 = vand.u32 %v439, 4294901760
    %v441 = vsub.f32 %v439, %v440
    %v442 = vand.u32 %v441, 4294901760
    %443 = vmatpush.msra.mxu0 %v442
    %v444 = vand.u32 %v323, 4294901760
    %v445 = vsub.f32 %v323, %v444
    %v446 = vand.u32 %v445, 4294901760
    %v447 = vsub.f32 %v445, %v446
    %v448 = vand.u32 %v447, 4294901760
    %449 = vmatpush.msra.mxu0 %v448
    %v450 = vand.u32 %v322, 4294901760
    %v451 = vsub.f32 %v322, %v450
    %v452 = vand.u32 %v451, 4294901760
    %v453 = vsub.f32 %v451, %v452
    %v454 = vand.u32 %v453, 4294901760
    %455 = vmatpush.msra.mxu0 %v454
    %v456 = vand.u32 %v356, 4294901760
    %457 = vmatmul.f32.gmra.mxu0 %v456
    %v458 = vpop.f32.mrf.mxu0
    %v459 = vadd.f32 %v394, %v458
    %v460 = vand.u32 %v359, 4294901760
    %461 = vmatmul.f32.gmra.mxu0 %v460
    %v462 = vpop.f32.mrf.mxu0
    %v463 = vadd.f32 %v402, %v462
    %v464 = vand.u32 %v362, 4294901760
    %465 = vmatmul.f32.gmra.mxu0 %v464
    %v466 = vpop.f32.mrf.mxu0
    %v467 = vadd.f32 %v410, %v466
    %v468 = vand.u32 %v365, 4294901760
    %469 = vmatmul.f32.gmra.mxu0 %v468
    %v470 = vpop.f32.mrf.mxu0
    %v471 = vadd.f32 %v418, %v470
    %472 = vdwg.mxu0
    %473 = vmatpush.msra.mxu0 0.0
    %474 = vmatpush.msra.mxu0 0.0
    %475 = vmatpush.msra.mxu0 0.0
    %476 = vmatpush.msra.mxu0 0.0
    %477 = vmatpush.msra.mxu0 0.0
    %478 = vmatpush.msra.mxu0 0.0
    %479 = vmatpush.msra.mxu0 0.0
    %480 = vmatpush.msra.mxu0 0.0
    %481 = vmatpush.msra.mxu0 0.0
    %482 = vmatpush.msra.mxu0 0.0
    %483 = vmatpush.msra.mxu0 0.0
    %484 = vmatpush.msra.mxu0 0.0
    %v485 = vand.u32 %v325, 4294901760
    %v486 = vsub.f32 %v325, %v485
    %487 = vmatpush.msra.mxu0 %v486
    %v488 = vand.u32 %v324, 4294901760
    %v489 = vsub.f32 %v324, %v488
    %490 = vmatpush.msra.mxu0 %v489
    %v491 = vand.u32 %v323, 4294901760
    %v492 = vsub.f32 %v323, %v491
    %493 = vmatpush.msra.mxu0 %v492
    %v494 = vand.u32 %v322, 4294901760
    %v495 = vsub.f32 %v322, %v494
    %496 = vmatpush.msra.mxu0 %v495
    %v497 = vand.u32 %v356, 4294901760
    %v498 = vsub.f32 %v356, %v497
    %499 = vmatmul.f32.gmra.mxu0 %v498
    %v500 = vpop.f32.mrf.mxu0
    %v501 = vadd.f32 %v459, %v500
    %v502 = vand.u32 %v359, 4294901760
    %v503 = vsub.f32 %v359, %v502
    %504 = vmatmul.f32.gmra.mxu0 %v503
    %v505 = vpop.f32.mrf.mxu0
    %v506 = vadd.f32 %v463, %v505
    %v507 = vand.u32 %v362, 4294901760
    %v508 = vsub.f32 %v362, %v507
    %509 = vmatmul.f32.gmra.mxu0 %v508
    %v510 = vpop.f32.mrf.mxu0
    %v511 = vadd.f32 %v467, %v510
    %v512 = vand.u32 %v365, 4294901760
    %v513 = vsub.f32 %v365, %v512
    %514 = vmatmul.f32.gmra.mxu0 %v513
    %v515 = vpop.f32.mrf.mxu0
    %v516 = vadd.f32 %v471, %v515
    %517 = vdwg.mxu0
    %518 = vmatpush.msra.mxu0 0.0
    %519 = vmatpush.msra.mxu0 0.0
    %520 = vmatpush.msra.mxu0 0.0
    %521 = vmatpush.msra.mxu0 0.0
    %522 = vmatpush.msra.mxu0 0.0
    %523 = vmatpush.msra.mxu0 0.0
    %524 = vmatpush.msra.mxu0 0.0
    %525 = vmatpush.msra.mxu0 0.0
    %526 = vmatpush.msra.mxu0 0.0
    %527 = vmatpush.msra.mxu0 0.0
    %528 = vmatpush.msra.mxu0 0.0
    %529 = vmatpush.msra.mxu0 0.0
    %v530 = vand.u32 %v325, 4294901760
    %531 = vmatpush.msra.mxu0 %v530
    %v532 = vand.u32 %v324, 4294901760
    %533 = vmatpush.msra.mxu0 %v532
    %v534 = vand.u32 %v323, 4294901760
    %535 = vmatpush.msra.mxu0 %v534
    %v536 = vand.u32 %v322, 4294901760
    %537 = vmatpush.msra.mxu0 %v536
    %v538 = vand.u32 %v356, 4294901760
    %v539 = vsub.f32 %v356, %v538
    %v540 = vand.u32 %v539, 4294901760
    %541 = vmatmul.f32.gmra.mxu0 %v540
    %v542 = vpop.f32.mrf.mxu0
    %v543 = vadd.f32 %v501, %v542
    %v544 = vand.u32 %v359, 4294901760
    %v545 = vsub.f32 %v359, %v544
    %v546 = vand.u32 %v545, 4294901760
    %547 = vmatmul.f32.gmra.mxu0 %v546
    %v548 = vpop.f32.mrf.mxu0
    %v549 = vadd.f32 %v506, %v548
    %v550 = vand.u32 %v362, 4294901760
    %v551 = vsub.f32 %v362, %v550
    %v552 = vand.u32 %v551, 4294901760
    %553 = vmatmul.f32.gmra.mxu0 %v552
    %v554 = vpop.f32.mrf.mxu0
    %v555 = vadd.f32 %v511, %v554
    %v556 = vand.u32 %v365, 4294901760
    %v557 = vsub.f32 %v365, %v556
    %v558 = vand.u32 %v557, 4294901760
    %559 = vmatmul.f32.gmra.mxu0 %v558
    %v560 = vpop.f32.mrf.mxu0
    %v561 = vadd.f32 %v516, %v560
    %562 = vdwg.mxu0
    %563 = vmatpush.msra.mxu0 0.0
    %564 = vmatpush.msra.mxu0 0.0
    %565 = vmatpush.msra.mxu0 0.0
    %566 = vmatpush.msra.mxu0 0.0
    %567 = vmatpush.msra.mxu0 0.0
    %568 = vmatpush.msra.mxu0 0.0
    %569 = vmatpush.msra.mxu0 0.0
    %570 = vmatpush.msra.mxu0 0.0
    %571 = vmatpush.msra.mxu0 0.0
    %572 = vmatpush.msra.mxu0 0.0
    %573 = vmatpush.msra.mxu0 0.0
    %574 = vmatpush.msra.mxu0 0.0
    %v575 = vand.u32 %v325, 4294901760
    %v576 = vsub.f32 %v325, %v575
    %v577 = vand.u32 %v576, 4294901760
    %578 = vmatpush.msra.mxu0 %v577
    %v579 = vand.u32 %v324, 4294901760
    %v580 = vsub.f32 %v324, %v579
    %v581 = vand.u32 %v580, 4294901760
    %582 = vmatpush.msra.mxu0 %v581
    %v583 = vand.u32 %v323, 4294901760
    %v584 = vsub.f32 %v323, %v583
    %v585 = vand.u32 %v584, 4294901760
    %586 = vmatpush.msra.mxu0 %v585
    %v587 = vand.u32 %v322, 4294901760
    %v588 = vsub.f32 %v322, %v587
    %v589 = vand.u32 %v588, 4294901760
    %590 = vmatpush.msra.mxu0 %v589
    %v591 = vand.u32 %v356, 4294901760
    %592 = vmatmul.f32.gmra.mxu0 %v591
    %v593 = vpop.f32.mrf.mxu0
    %v594 = vadd.f32 %v543, %v593
    %v595 = vand.u32 %v359, 4294901760
    %596 = vmatmul.f32.gmra.mxu0 %v595
    %v597 = vpop.f32.mrf.mxu0
    %v598 = vadd.f32 %v549, %v597
    %v599 = vand.u32 %v362, 4294901760
    %600 = vmatmul.f32.gmra.mxu0 %v599
    %v601 = vpop.f32.mrf.mxu0
    %v602 = vadd.f32 %v555, %v601
    %v603 = vand.u32 %v365, 4294901760
    %604 = vmatmul.f32.gmra.mxu0 %v603
    %v605 = vpop.f32.mrf.mxu0
    %v606 = vadd.f32 %v561, %v605
    %607 = vdwg.mxu0
    %608 = vmatpush.msra.mxu0 0.0
    %609 = vmatpush.msra.mxu0 0.0
    %610 = vmatpush.msra.mxu0 0.0
    %611 = vmatpush.msra.mxu0 0.0
    %612 = vmatpush.msra.mxu0 0.0
    %613 = vmatpush.msra.mxu0 0.0
    %614 = vmatpush.msra.mxu0 0.0
    %615 = vmatpush.msra.mxu0 0.0
    %616 = vmatpush.msra.mxu0 0.0
    %617 = vmatpush.msra.mxu0 0.0
    %618 = vmatpush.msra.mxu0 0.0
    %619 = vmatpush.msra.mxu0 0.0
    %v620 = vand.u32 %v325, 4294901760
    %621 = vmatpush.msra.mxu0 %v620
    %v622 = vand.u32 %v324, 4294901760
    %623 = vmatpush.msra.mxu0 %v622
    %v624 = vand.u32 %v323, 4294901760
    %625 = vmatpush.msra.mxu0 %v624
    %v626 = vand.u32 %v322, 4294901760
    %627 = vmatpush.msra.mxu0 %v626
    %v628 = vand.u32 %v356, 4294901760
    %629 = vmatmul.f32.gmra.mxu0 %v628
    %v630 = vpop.f32.mrf.mxu0
    %v631 = vadd.f32 %v594, %v630
    %v632 = vand.u32 %v359, 4294901760
    %633 = vmatmul.f32.gmra.mxu0 %v632
    %v634 = vpop.f32.mrf.mxu0
    %v635 = vadd.f32 %v598, %v634
    %v636 = vand.u32 %v362, 4294901760
    %637 = vmatmul.f32.gmra.mxu0 %v636
    %v638 = vpop.f32.mrf.mxu0
    %v639 = vadd.f32 %v602, %v638
    %v640 = vand.u32 %v365, 4294901760
    %641 = vmatmul.f32.gmra.mxu0 %v640
    %v642 = vpop.f32.mrf.mxu0
    %v643 = vadd.f32 %v606, %v642
    %644 = vdwg.mxu0
    %v645 = vtanh.pop %v631
    %v646 = vtanh.pop %v635
    %v647 = vtanh.pop %v639
    %v648 = vtanh.pop %v643
    %v649 = vld [vmem:[%s5] sm:$0xff]
    %v650 = vld [vmem:[%s6] sm:$0xff]
    %652 = vset.pattern.permute.xlu0 0
    %653 = vperm.xlu0 %652, %v650
    %v654 = vpop.permute.xlu0 %653
    %v657 = vsel %vm354, %v649, 0
    %659 = vmatpush.msra.mxu0 0.0
    %660 = vmatpush.msra.mxu0 0.0
    %661 = vmatpush.msra.mxu0 0.0
    %662 = vmatpush.msra.mxu0 0.0
    %663 = vmatpush.msra.mxu0 0.0
    %664 = vmatpush.msra.mxu0 0.0
    %665 = vmatpush.msra.mxu0 0.0
    %666 = vmatpush.msra.mxu0 0.0
    %667 = vmatpush.msra.mxu0 0.0
    %668 = vmatpush.msra.mxu0 0.0
    %669 = vmatpush.msra.mxu0 0.0
    %670 = vmatpush.msra.mxu0 0.0
    %v671 = vand.u32 %v648, 4294901760
    %672 = vmatpush.msra.mxu0 %v671
    %v673 = vand.u32 %v647, 4294901760
    %674 = vmatpush.msra.mxu0 %v673
    %v675 = vand.u32 %v646, 4294901760
    %676 = vmatpush.msra.mxu0 %v675
    %v677 = vand.u32 %v645, 4294901760
    %678 = vmatpush.msra.mxu0 %v677
    %v679 = vand.u32 %v657, 4294901760
    %v680 = vsub.f32 %v657, %v679
    %v681 = vand.u32 %v680, 4294901760
    %v682 = vsub.f32 %v680, %v681
    %v683 = vand.u32 %v682, 4294901760
    %684 = vmatmul.f32.gmra.mxu0 %v683
    %v685 = vpop.f32.mrf.mxu0
    %v686 = vadd.f32 %v654, %v685
    %687 = vdwg.mxu0
    %688 = vmatpush.msra.mxu0 0.0
    %689 = vmatpush.msra.mxu0 0.0
    %690 = vmatpush.msra.mxu0 0.0
    %691 = vmatpush.msra.mxu0 0.0
    %692 = vmatpush.msra.mxu0 0.0
    %693 = vmatpush.msra.mxu0 0.0
    %694 = vmatpush.msra.mxu0 0.0
    %695 = vmatpush.msra.mxu0 0.0
    %696 = vmatpush.msra.mxu0 0.0
    %697 = vmatpush.msra.mxu0 0.0
    %698 = vmatpush.msra.mxu0 0.0
    %699 = vmatpush.msra.mxu0 0.0
    %v700 = vand.u32 %v648, 4294901760
    %v701 = vsub.f32 %v648, %v700
    %v702 = vand.u32 %v701, 4294901760
    %v703 = vsub.f32 %v701, %v702
    %v704 = vand.u32 %v703, 4294901760
    %705 = vmatpush.msra.mxu0 %v704
    %v706 = vand.u32 %v647, 4294901760
    %v707 = vsub.f32 %v647, %v706
    %v708 = vand.u32 %v707, 4294901760
    %v709 = vsub.f32 %v707, %v708
    %v710 = vand.u32 %v709, 4294901760
    %711 = vmatpush.msra.mxu0 %v710
    %v712 = vand.u32 %v646, 4294901760
    %v713 = vsub.f32 %v646, %v712
    %v714 = vand.u32 %v713, 4294901760
    %v715 = vsub.f32 %v713, %v714
    %v716 = vand.u32 %v715, 4294901760
    %717 = vmatpush.msra.mxu0 %v716
    %v718 = vand.u32 %v645, 4294901760
    %v719 = vsub.f32 %v645, %v718
    %v720 = vand.u32 %v719, 4294901760
    %v721 = vsub.f32 %v719, %v720
    %v722 = vand.u32 %v721, 4294901760
    %723 = vmatpush.msra.mxu0 %v722
    %v724 = vand.u32 %v657, 4294901760
    %725 = vmatmul.f32.gmra.mxu0 %v724
    %v726 = vpop.f32.mrf.mxu0
    %v727 = vadd.f32 %v686, %v726
    %728 = vdwg.mxu0
    %729 = vmatpush.msra.mxu0 0.0
    %730 = vmatpush.msra.mxu0 0.0
    %731 = vmatpush.msra.mxu0 0.0
    %732 = vmatpush.msra.mxu0 0.0
    %733 = vmatpush.msra.mxu0 0.0
    %734 = vmatpush.msra.mxu0 0.0
    %735 = vmatpush.msra.mxu0 0.0
    %736 = vmatpush.msra.mxu0 0.0
    %737 = vmatpush.msra.mxu0 0.0
    %738 = vmatpush.msra.mxu0 0.0
    %739 = vmatpush.msra.mxu0 0.0
    %740 = vmatpush.msra.mxu0 0.0
    %v741 = vand.u32 %v648, 4294901760
    %v742 = vsub.f32 %v648, %v741
    %743 = vmatpush.msra.mxu0 %v742
    %v744 = vand.u32 %v647, 4294901760
    %v745 = vsub.f32 %v647, %v744
    %746 = vmatpush.msra.mxu0 %v745
    %v747 = vand.u32 %v646, 4294901760
    %v748 = vsub.f32 %v646, %v747
    %749 = vmatpush.msra.mxu0 %v748
    %v750 = vand.u32 %v645, 4294901760
    %v751 = vsub.f32 %v645, %v750
    %752 = vmatpush.msra.mxu0 %v751
    %v753 = vand.u32 %v657, 4294901760
    %v754 = vsub.f32 %v657, %v753
    %755 = vmatmul.f32.gmra.mxu0 %v754
    %v756 = vpop.f32.mrf.mxu0
    %v757 = vadd.f32 %v727, %v756
    %758 = vdwg.mxu0
    %759 = vmatpush.msra.mxu0 0.0
    %760 = vmatpush.msra.mxu0 0.0
    %761 = vmatpush.msra.mxu0 0.0
    %762 = vmatpush.msra.mxu0 0.0
    %763 = vmatpush.msra.mxu0 0.0
    %764 = vmatpush.msra.mxu0 0.0
    %765 = vmatpush.msra.mxu0 0.0
    %766 = vmatpush.msra.mxu0 0.0
    %767 = vmatpush.msra.mxu0 0.0
    %768 = vmatpush.msra.mxu0 0.0
    %769 = vmatpush.msra.mxu0 0.0
    %770 = vmatpush.msra.mxu0 0.0
    %v771 = vand.u32 %v648, 4294901760
    %772 = vmatpush.msra.mxu0 %v771
    %v773 = vand.u32 %v647, 4294901760
    %774 = vmatpush.msra.mxu0 %v773
    %v775 = vand.u32 %v646, 4294901760
    %776 = vmatpush.msra.mxu0 %v775
    %v777 = vand.u32 %v645, 4294901760
    %778 = vmatpush.msra.mxu0 %v777
    %v779 = vand.u32 %v657, 4294901760
    %v780 = vsub.f32 %v657, %v779
    %v781 = vand.u32 %v780, 4294901760
    %782 = vmatmul.f32.gmra.mxu0 %v781
    %v783 = vpop.f32.mrf.mxu0
    %v784 = vadd.f32 %v757, %v783
    %785 = vdwg.mxu0
    %786 = vmatpush.msra.mxu0 0.0
    %787 = vmatpush.msra.mxu0 0.0
    %788 = vmatpush.msra.mxu0 0.0
    %789 = vmatpush.msra.mxu0 0.0
    %790 = vmatpush.msra.mxu0 0.0
    %791 = vmatpush.msra.mxu0 0.0
    %792 = vmatpush.msra.mxu0 0.0
    %793 = vmatpush.msra.mxu0 0.0
    %794 = vmatpush.msra.mxu0 0.0
    %795 = vmatpush.msra.mxu0 0.0
    %796 = vmatpush.msra.mxu0 0.0
    %797 = vmatpush.msra.mxu0 0.0
    %v798 = vand.u32 %v648, 4294901760
    %v799 = vsub.f32 %v648, %v798
    %v800 = vand.u32 %v799, 4294901760
    %801 = vmatpush.msra.mxu0 %v800
    %v802 = vand.u32 %v647, 4294901760
    %v803 = vsub.f32 %v647, %v802
    %v804 = vand.u32 %v803, 4294901760
    %805 = vmatpush.msra.mxu0 %v804
    %v806 = vand.u32 %v646, 4294901760
    %v807 = vsub.f32 %v646, %v806
    %v808 = vand.u32 %v807, 4294901760
    %809 = vmatpush.msra.mxu0 %v808
    %v810 = vand.u32 %v645, 4294901760
    %v811 = vsub.f32 %v645, %v810
    %v812 = vand.u32 %v811, 4294901760
    %813 = vmatpush.msra.mxu0 %v812
    %v814 = vand.u32 %v657, 4294901760
    %815 = vmatmul.f32.gmra.mxu0 %v814
    %v816 = vpop.f32.mrf.mxu0
    %v817 = vadd.f32 %v784, %v816
    %818 = vdwg.mxu0
    %819 = vmatpush.msra.mxu0 0.0
    %820 = vmatpush.msra.mxu0 0.0
    %821 = vmatpush.msra.mxu0 0.0
    %822 = vmatpush.msra.mxu0 0.0
    %823 = vmatpush.msra.mxu0 0.0
    %824 = vmatpush.msra.mxu0 0.0
    %825 = vmatpush.msra.mxu0 0.0
    %826 = vmatpush.msra.mxu0 0.0
    %827 = vmatpush.msra.mxu0 0.0
    %828 = vmatpush.msra.mxu0 0.0
    %829 = vmatpush.msra.mxu0 0.0
    %830 = vmatpush.msra.mxu0 0.0
    %v831 = vand.u32 %v648, 4294901760
    %832 = vmatpush.msra.mxu0 %v831
    %v833 = vand.u32 %v647, 4294901760
    %834 = vmatpush.msra.mxu0 %v833
    %v835 = vand.u32 %v646, 4294901760
    %836 = vmatpush.msra.mxu0 %v835
    %v837 = vand.u32 %v645, 4294901760
    %838 = vmatpush.msra.mxu0 %v837
    %v839 = vand.u32 %v657, 4294901760
    %840 = vmatmul.f32.gmra.mxu0 %v839
    %v841 = vpop.f32.mrf.mxu0
    %v842 = vadd.f32 %v817, %v841
    %843 = vdwg.mxu0
    %vm844 = vcmask 64512
    %845 = vst.msk [vmem:[#allocation2] sm:$0xff] %vm844, %v842
    // Predicated region
    $region30: #{tpu_custom_call.1} parent=1 // pred_check
      _
    $region31: #{tpu_custom_call.1} parent=1 // pred_check_branch
      %847 = sbr.rel (0) target = $region33
    $region32: #{tpu_custom_call.1} parent=1 // pred_region
      %849 = vsyncadd [#allocation3], 0
      %s851 = sshll.u32 [#allocation2], 4
      %s852 = int_to_ptr.vmem [resolvable:$true] %s851
      %s853 = sshll.u32 %s7, 4
      %s854 = int_to_ptr.hbm [resolvable:$true] %s853
      %856 = dma.vmem_to_hbm [thread:$0]  %s852, 128, %s854, [#allocation3]
    $region33: #{tpu_custom_call.1} parent=1 // pred_fallthru
      _
    // Predicated region
    $region34: #{tpu_custom_call.1} parent=1 // pred_check
      _
    $region35: #{tpu_custom_call.1} parent=1 // pred_check_branch
      %858 = sbr.rel (0) target = $region37
    $region36: #{tpu_custom_call.1} parent=1 // pred_region
      %860 = dma.done [#allocation3], 128
    $region37: #{tpu_custom_call.1} parent=1 // pred_fallthru
      _
    %861 = vsyncpa [#allocation3], 1

</llo_original>
